<compile_context>
chip_gen: v6e
topology: v6e:2x2x1
jax: 0.10.0
libtpu: 0.0.40
codegen_flags: <defaults>
</compile_context>

<pallas_src>
import math
import numpy as np
import jax
import jax.numpy as jnp
from jax.experimental import pallas as pl
from jax.experimental.pallas import tpu as pltpu

_LANE = 128                              # TPU vreg lane width
_SUBLANE_F32 = 8                         # f32 sublane count; packed dtypes use 16/32
_TILE_BUDGET_BYTES = 4 * 1024 * 1024     # per-buffer tile cap (~6 live buffers -> ~24 MiB VMEM)
_VMEM_LIMIT_BYTES = 32 * 1024 * 1024     # explicit scoped-VMEM budget (v5e/v6e/v7x safe)


def make_sinusoid_table(n_position: int, d_hid: int) -> jnp.ndarray:
    """Deterministic sinusoidal table, identical math to the PyTorch module."""
    pos = np.arange(n_position, dtype=np.float64)[:, None]              # (P, 1)
    hid = np.arange(d_hid, dtype=np.int64)[None, :]                     # (1, D)
    angle = pos / np.power(10000.0, 2.0 * (hid // 2) / float(d_hid))    # (P, D)
    table = np.empty_like(angle)
    table[:, 0::2] = np.sin(angle[:, 0::2])
    table[:, 1::2] = np.cos(angle[:, 1::2])
    return jnp.asarray(table, dtype=jnp.float32)                        # (P, D)


def _pos_enc_kernel(x_ref, pos_ref, o_ref):
    # x_ref / o_ref: (tb, ts, cols) tile; pos_ref: (ts, cols) tile of the position table.
    # Broadcast add over the batch tile dim — pure VPU work, kernel is DMA-bound anyway.
    o_ref[...] = (x_ref[...] + pos_ref[...][None]).astype(o_ref.dtype)


def _sublane_multiple(dtype) -> int:
    """Packed-sublane row multiple: 8 for f32, 16 for bf16/f16, 32 for int8/fp8."""
    return max(_SUBLANE_F32, 32 // jnp.dtype(dtype).itemsize)


def _plan(B: int, S: int, D: int, dtype):
    """Lane fold + padding + tile sizes. Returns (k, s_pad, rows, cols, ts, tb)."""
    itemsize = jnp.dtype(dtype).itemsize
    # Fold factor k so cols = k*D is a multiple of 128 (k == 1 when D already is).
    k = 1 if D % _LANE == 0 else _LANE // math.gcd(D, _LANE)
    s_pad = pl.cdiv(S, k) * k            # pad seq so the fold always succeeds (lane-dense stores)
    rows, cols = s_pad // k, k * D

    row_bytes = cols * itemsize
    slab_bytes = rows * row_bytes        # one batch element's folded slab
    sub = _sublane_multiple(dtype)

    if slab_bytes <= _TILE_BUDGET_BYTES:
        # Small per-batch slab: take the whole slab and pack batch elements up to the budget.
        ts = rows
        tb = max(1, min(B, _TILE_BUDGET_BYTES // max(slab_bytes, 1)))
    else:
        # Large slab: tile the (folded) sequence axis by the byte budget only.
        cap = _TILE_BUDGET_BYTES // row_bytes
        cap -= cap % sub
        cap = max(cap, sub)
        ts = min(rows, cap)
        tb = 1
    return k, s_pad, rows, cols, ts, tb


def _prepare_pos(pos_table: jnp.ndarray, S: int, dtype, s_pad: int, rows: int, cols: int):
    """Slice to S, cast to activation dtype, pad, fold to (rows, cols)."""
    pos = pos_table[:S, :].astype(dtype)
    if s_pad != S:
        pos = jnp.pad(pos, ((0, s_pad - S), (0, 0)))
    return pos.reshape(rows, cols)


def _pos_add(xr: jnp.ndarray, posr: jnp.ndarray, ts: int, tb: int, in_place: bool):
    """pallas_call on the folded (B, rows, cols) activation and (rows, cols) pos table."""
    B, rows, cols = xr.shape
    num_s = pl.cdiv(rows, ts)
    num_b = pl.cdiv(B, tb)

    if num_s == 1 and num_b > 1:
        # Batch-major so the leading parallel axis has extent >= 2 (v7x 2-TC balance).
        grid = (num_b, num_s)
        x_map = lambda b, s: (b, s, 0)
        pos_map = lambda b, s: (s, 0)
    else:
        # Batch innermost: pos block index constant across b -> each pos tile DMA'd once per s-tile.
        grid = (num_s, num_b)
        x_map = lambda s, b: (b, s, 0)
        pos_map = lambda s, b: (s, 0)

    itemsize = jnp.dtype(xr.dtype).itemsize
    cost = pl.CostEstimate(
        flops=B * rows * cols,
        transcendentals=0,
        bytes_accessed=(2 * B + 1) * rows * cols * itemsize,
    )

    return pl.pallas_call(
        _pos_enc_kernel,
        out_shape=jax.ShapeDtypeStruct((B, rows, cols), xr.dtype),
        grid_spec=pltpu.PrefetchScalarGridSpec(
            num_scalar_prefetch=0,
            grid=grid,
            in_specs=[
                pl.BlockSpec((tb, ts, cols), x_map),
                pl.BlockSpec((ts, cols), pos_map),
            ],
            out_specs=pl.BlockSpec((tb, ts, cols), x_map),
        ),
        compiler_params=pltpu.CompilerParams(
            dimension_semantics=("parallel", "parallel"),
            vmem_limit_bytes=_VMEM_LIMIT_BYTES,
        ),
        cost_estimate=cost,
        # Alias x's HBM buffer in place only when the caller donates x (opt-in).
        input_output_aliases=({0: 0} if in_place else {}),
    )(xr, posr)


def positional_encoding(x: jnp.ndarray, pos_table: jnp.ndarray, *, in_place: bool = False):
    """x: (B, S, D); pos_table: (n_position, D). Returns x + pos_table[:S] (broadcast over B)."""
    B, S, D = x.shape
    P, Dt = pos_table.shape
    if Dt != D:
        raise ValueError(f"pos_table hidden dim {Dt} != input hidden dim {D}")
    if S > P:
        raise ValueError(f"sequence length {S} exceeds n_position {P}")

    k, s_pad, rows, cols, ts, tb = _plan(B, S, D, x.dtype)
    posr = _prepare_pos(pos_table, S, x.dtype, s_pad, rows, cols)

    xp = x if s_pad == S else jnp.pad(x, ((0, 0), (0, s_pad - S), (0, 0)))
    xr = xp.reshape(B, rows, cols)       # contiguous trailing-dim fold: layout plumbing only

    out = _pos_add(xr, posr, ts, tb, in_place).reshape(B, s_pad, D)
    return out if s_pad == S else out[:, :S, :]


class PositionalEncoding:
    """Mirror of the PyTorch module; caches the cast+folded pos table per (seq_len, dtype)."""

    def __init__(self, d_hid: int, n_position: int = 200):
        self.d_hid = d_hid
        self.n_position = n_position
        self.pos_table = make_sinusoid_table(n_position, d_hid)   # (P, D) f32 buffer
        self._cache = {}                                           # (S, dtype name) -> folded pos

    def __call__(self, x: jnp.ndarray, *, in_place: bool = False) -> jnp.ndarray:
        B, S, D = x.shape
        if D != self.d_hid:
            raise ValueError(f"hidden dim {D} != d_hid {self.d_hid}")
        if S > self.n_position:
            raise ValueError(f"sequence length {S} exceeds n_position {self.n_position}")

        k, s_pad, rows, cols, ts, tb = _plan(B, S, D, x.dtype)
        key = (S, jnp.dtype(x.dtype).name)
        posr = self._cache.get(key)
        if posr is None:
            posr = self._cache[key] = _prepare_pos(self.pos_table, S, x.dtype, s_pad, rows, cols)

        xp = x if s_pad == S else jnp.pad(x, ((0, 0), (0, s_pad - S), (0, 0)))
        xr = xp.reshape(B, rows, cols)
        out = _pos_add(xr, posr, ts, tb, in_place).reshape(B, s_pad, D)
        return out if s_pad == S else out[:, :S, :]


if __name__ == "__main__":
    key = jax.random.PRNGKey(0)

    # Primary small test matching the module defaults: B=2, S=8, D=32 (f32).
    B, S, D = 2, 8, 32
    enc = PositionalEncoding(D, n_position=200)
    x = jax.random.normal(key, (B, S, D), dtype=jnp.float32)

    out = jax.block_until_ready(enc(x))
    ref = x + enc.pos_table[None, :S, :]
    assert out.shape == (B, S, D)
    assert jnp.allclose(out, ref, atol=1e-6), "mismatch vs reference (f32)"

    # Secondary small test: bf16 activations + seq length that needs lane-fold padding
    # (D=96 -> fold k=4, S=10 padded to 12 rows; exercises pad/slice + batch packing path).
    B2, S2, D2 = 3, 10, 96
    enc2 = PositionalEncoding(D2, n_position=64)
    k2, _ = jax.random.split(key)
    x2 = jax.random.normal(k2, (B2, S2, D2), dtype=jnp.float32).astype(jnp.bfloat16)

    out2 = jax.block_until_ready(enc2(x2))
    ref2 = x2 + enc2.pos_table[None, :S2, :].astype(jnp.bfloat16)
    assert out2.shape == (B2, S2, D2)
    assert jnp.allclose(out2.astype(jnp.float32), ref2.astype(jnp.float32), atol=1e-2), \
        "mismatch vs reference (bf16 / padded fold)"

    print("KERNEL_OK")
</pallas_src>

<mosaic_0001>
module attributes {stable_mosaic.version = 11 : i64} {
  func.func @_pos_enc_kernel(%arg0: i32, %arg1: i32, %arg2: memref<2x2x128xf32, #tpu.memory_space<vmem>>, %arg3: memref<2x128xf32, #tpu.memory_space<vmem>>, %arg4: memref<2x2x128xf32, #tpu.memory_space<vmem>>) attributes {dimension_semantics = [#tpu.dimension_semantics<parallel>, #tpu.dimension_semantics<parallel>], iteration_bounds = array<i64: 1, 1>, scalar_prefetch = 0 : i64, scratch_operands = 0 : i64, tpu.core_type = #tpu.core_type<tc>, window_params = [{transform_indices = @transform_0, window_bounds = array<i64: 2, 2, 128>}, {transform_indices = @transform_1, window_bounds = array<i64: 2, 128>}, {transform_indices = @transform_2, window_bounds = array<i64: 2, 2, 128>}]} {
    %c0 = arith.constant 0 : index
    %c0_0 = arith.constant 0 : index
    %c0_1 = arith.constant 0 : index
    %0 = vector.load %arg2[%c0, %c0_0, %c0_1] : memref<2x2x128xf32, #tpu.memory_space<vmem>>, vector<2x2x128xf32>
    %c0_2 = arith.constant 0 : index
    %c0_3 = arith.constant 0 : index
    %1 = vector.load %arg3[%c0_2, %c0_3] : memref<2x128xf32, #tpu.memory_space<vmem>>, vector<2x128xf32>
    %2 = vector.shape_cast %1 : vector<2x128xf32> to vector<1x2x128xf32>
    %3 = vector.broadcast %2 : vector<1x2x128xf32> to vector<2x2x128xf32>
    %4 = arith.addf %0, %3 : vector<2x2x128xf32>
    %c0_4 = arith.constant 0 : index
    %c0_5 = arith.constant 0 : index
    %c0_6 = arith.constant 0 : index
    %5 = vector.load %arg4[%c0_4, %c0_5, %c0_6] : memref<2x2x128xf32, #tpu.memory_space<vmem>>, vector<2x2x128xf32>
    tpu.vector_store %arg4[%c0_4, %c0_5, %c0_6], %4 {strides = array<i32>} : memref<2x2x128xf32, #tpu.memory_space<vmem>>, vector<2x2x128xf32>,
    return
  }
  func.func @transform_0(%arg0: i32, %arg1: i32) -> (i32, i32, i32) {
    %c0_i32 = arith.constant 0 : i32
    %c0_i32_0 = arith.constant 0 : i32
    return %arg1, %arg0, %c0_i32 : i32, i32, i32
  }
  func.func @transform_1(%arg0: i32, %arg1: i32) -> (i32, i32) {
    %c0_i32 = arith.constant 0 : i32
    %c0_i32_0 = arith.constant 0 : i32
    return %arg0, %c0_i32 : i32, i32
  }
  func.func @transform_2(%arg0: i32, %arg1: i32) -> (i32, i32, i32) {
    %c0_i32 = arith.constant 0 : i32
    %c0_i32_0 = arith.constant 0 : i32
    return %arg1, %arg0, %c0_i32 : i32, i32, i32
  }
}

</mosaic_0001>

<llo_original>
// kernel: tpu_custom_call.1
$region0: #{tpu_custom_call.1}
  #allocation0 [shape = 'u32[]', space=smem, size = 0x4, offset = 0x4, fixed_abs, tag = 'smem constant byte address 0x4 - core index']
  #allocation1 [shape = 'u32[144,128]{1,0:T(1,128)}', space=vmem, size = 0x12000, scoped, tag = 'internal scratch']
  %s0 = inlined_call_operand.hbm [shape: f32[2,2,128], index: 0, kind: input, shape index: {}]
  %s1 = inlined_call_operand.hbm [shape: f32[2,128], index: 1, kind: input, shape index: {}]
  %s2 = inlined_call_operand.hbm [shape: f32[2,2,128], index: 2, kind: output, shape index: {}]
  %s3 = sld [smem:[#allocation0]]
  $region26: #{tpu_custom_call.1} parent=0
    _
  %s5 = ssub.s32 1, %s3
  %s6 = scalar_select 0, %s5, %s3
  $region1: #{tpu_custom_call.1} parent=0
    #allocation2 [shape = 'u8[2048]{0}', space=vmem, size = 0x800, scoped, tag = 'input window, operand 0, single buffered']
    #allocation3 [shape = 's32[1]{0}', space=sflag, size = 0x4, scoped, tag = 'scoped memory for tpu_custom_call.1']
    #allocation4 [shape = 's32[1]{0}', space=sflag, size = 0x4, scoped, tag = 'scoped memory for tpu_custom_call.1']
    #allocation5 [shape = 'u8[1024]{0}', space=vmem, size = 0x400, scoped, tag = 'input window, operand 1, single buffered']
    #allocation6 [shape = 's32[1]{0}', space=sflag, size = 0x4, scoped, tag = 'scoped memory for tpu_custom_call.1']
    #allocation7 [shape = 'u8[2048]{0}', space=vmem, size = 0x800, scoped, tag = 'output window, operand 0, single buffered']
    %7 = vsyncpa [#allocation3], 0
    %8 = vsyncpa [#allocation6], 0
    %9 = vsyncpa [#allocation4], 0
    // Predicated region
    $region2: #{tpu_custom_call.1} parent=1 // pred_check
      _
    $region3: #{tpu_custom_call.1} parent=1 // pred_check_branch
      %11 = sbr.rel (0) target = $region5
    $region4: #{tpu_custom_call.1} parent=1 // pred_region
      %s13 = ssub.s32 64, 64
      %14 = vsyncadd [#allocation3], %s13
      %s15 = sshll.u32 [#allocation2], 4
      %s16 = int_to_ptr.vmem [resolvable:$true] %s15
      %21 = dma.hbm_to_vmem [thread:$0]  %s0, 64, %s16, [#allocation3], 32, 32, 2
    $region5: #{tpu_custom_call.1} parent=1 // pred_fallthru
      _
    // Predicated region
    $region6: #{tpu_custom_call.1} parent=1 // pred_check
      _
    $region7: #{tpu_custom_call.1} parent=1 // pred_check_branch
      %23 = sbr.rel (0) target = $region9
    $region8: #{tpu_custom_call.1} parent=1 // pred_region
      %s25 = ssub.s32 32, 32
      %26 = vsyncadd [#allocation6], %s25
      %s28 = sshll.u32 [#allocation5], 4
      %s29 = int_to_ptr.vmem [resolvable:$true] %s28
      %31 = dma.hbm_to_vmem [thread:$0]  %s1, 32, %s29, [#allocation6]
    $region9: #{tpu_custom_call.1} parent=1 // pred_fallthru
      _
    // Predicated region
    $region10: #{tpu_custom_call.1} parent=1 // pred_check
      _
    $region11: #{tpu_custom_call.1} parent=1 // pred_check_branch
      %33 = sbr.rel (0) target = $region13
    $region12: #{tpu_custom_call.1} parent=1 // pred_region
      %34 = dma.done [#allocation3], 64
    $region13: #{tpu_custom_call.1} parent=1 // pred_fallthru
      _
    // Predicated region
    $region14: #{tpu_custom_call.1} parent=1 // pred_check
      _
    $region15: #{tpu_custom_call.1} parent=1 // pred_check_branch
      %36 = sbr.rel (0) target = $region17
    $region16: #{tpu_custom_call.1} parent=1 // pred_region
      %37 = dma.done [#allocation6], 32
    $region17: #{tpu_custom_call.1} parent=1 // pred_fallthru
      _
    %v38 = vld [vmem:[#allocation2] sm:$0x3]
    %v39 = vld [vmem:[#allocation2 + $0x2] sm:$0x3]
    %v40 = vld [vmem:[#allocation5] sm:$0x3]
    %v41 = vadd.f32 %v38, %v40
    %v42 = vadd.f32 %v39, %v40
    %43 = vst [vmem:[#allocation7] sm:$0x3] %v41
    %44 = vst [vmem:[#allocation7 + $0x2] sm:$0x3] %v42
    // Predicated region
    $region18: #{tpu_custom_call.1} parent=1 // pred_check
      _
    $region19: #{tpu_custom_call.1} parent=1 // pred_check_branch
      %46 = sbr.rel (0) target = $region21
    $region20: #{tpu_custom_call.1} parent=1 // pred_region
      %s48 = ssub.s32 64, 64
      %49 = vsyncadd [#allocation4], %s48
      %s50 = sshll.u32 [#allocation7], 4
      %s51 = int_to_ptr.vmem [resolvable:$true] %s50
      %56 = dma.vmem_to_hbm [thread:$0]  %s51, 64, %s2, [#allocation4], 32, 32, 2
    $region21: #{tpu_custom_call.1} parent=1 // pred_fallthru
      _
    // Predicated region
    $region22: #{tpu_custom_call.1} parent=1 // pred_check
      _
    $region23: #{tpu_custom_call.1} parent=1 // pred_check_branch
      %58 = sbr.rel (0) target = $region25
    $region24: #{tpu_custom_call.1} parent=1 // pred_region
      %59 = dma.done [#allocation4], 64
    $region25: #{tpu_custom_call.1} parent=1 // pred_fallthru
      _
    %60 = vsyncpa [#allocation3], 1
    %61 = vsyncpa [#allocation6], 1
    %62 = vsyncpa [#allocation4], 1

</llo_original>
